<compile_context>
chip_gen: v7x
topology: tpu7x:2x2x1
jax: 0.10.0
libtpu: 0.0.40
codegen_flags: <defaults>
</compile_context>

<pallas_src>
import functools

import jax
import jax.numpy as jnp
import numpy as np
from jax.experimental import pallas as pl
from jax.experimental.pallas import tpu as pltpu

_LANE = 128
# Packed-state row layout inside the (8, lanes) f32 tile.
_ROW_MEAN_L_BIG = 0   # running_mean_L
_ROW_MEAN_l = 1       # running_mean_l
_ROW_S_l = 2          # running_S_l
_ROW_STD_l = 3        # running_std_l
_ROW_ALPHAS = 4       # alphas
_NUM_ROWS = 8         # rows 5..7 stay zero (padding to a full sublane tile)


def _cov_weighting_kernel(num_losses, decay_flag, decay_param,
                          iter_ref, L_ref, state_ref,
                          state_out_ref, iter_out_ref, loss_ref):
    # ---- scalars (SMEM) -----------------------------------------------------
    t = iter_ref[0] + 1                       # post-increment iteration
    it_f = t.astype(jnp.float32)
    inv_it1 = 1.0 / (it_f + 1.0)              # hoisted, reused twice

    # ---- packed per-loss vectors (one VMEM tile, loaded once) ---------------
    st = state_ref[...]                       # (8, lanes) full-tile load
    L = L_ref[...]                            # (1, lanes), pad lanes == 0
    mean_L = st[_ROW_MEAN_L_BIG:_ROW_MEAN_L_BIG + 1, :]
    mean_l = st[_ROW_MEAN_l:_ROW_MEAN_l + 1, :]
    S_l = st[_ROW_S_l:_ROW_S_l + 1, :]
    std_l = st[_ROW_STD_l:_ROW_STD_l + 1, :]

    lanes = L.shape[-1]
    lane_idx = jax.lax.broadcasted_iota(jnp.int32, (1, lanes), 1)
    valid = lane_idx < num_losses

    # l = L / L0  (L0 = L on the very first iteration, else running_mean_L).
    # Pad lanes are guarded (would be 0/0).
    L0 = jnp.where(t == 0, L, mean_L)
    L0 = jnp.where(valid, L0, jnp.float32(1.0))
    l = L * pl.reciprocal(L0)

    # Coefficient-of-variation per loss (pad lanes forced to 0).
    mean_l_safe = jnp.where(mean_l == 0.0, jnp.float32(1.0), mean_l)
    ls = jnp.where(valid, std_l * pl.reciprocal(mean_l_safe), jnp.float32(0.0))

    # Three INDEPENDENT lane reductions (no divide between them).
    sum_ls = jnp.sum(ls, axis=-1, keepdims=True)              # (1, 1)
    sum_lsL = jnp.sum(ls * L, axis=-1, keepdims=True)         # (1, 1)
    sum_L = jnp.sum(L, axis=-1, keepdims=True)                # (1, 1)

    sum_ls_safe = jnp.where(sum_ls == 0.0, jnp.float32(1.0), sum_ls)
    inv_sum_ls = pl.reciprocal(sum_ls_safe)                   # (1, 1)

    # Weighted loss: uniform while iter <= 1, CoV weights after.
    loss_unif = sum_L * jnp.float32(1.0 / num_losses)
    loss_cov = sum_lsL * inv_sum_ls
    loss_ref[...] = jnp.where(t <= 1, loss_unif, loss_cov)    # (1, 1) store

    # alphas (only needed for the state writeback, off the loss path).
    alphas_cov = ls * inv_sum_ls
    alphas_unif = jnp.where(valid, jnp.float32(1.0 / num_losses),
                            jnp.float32(0.0))
    alphas = jnp.where(t <= 1, alphas_unif, alphas_cov)

    # mean_param: 0 at iter 0, decay_param when decaying, else 1 - 1/(iter+1).
    if decay_flag:                            # static Python branch
        mp_pos = jnp.float32(decay_param)
    else:
        mp_pos = 1.0 - inv_it1
    mp = jnp.where(t == 0, jnp.float32(0.0), mp_pos)

    # Welford-style running statistics of l, running mean of L.
    new_mean_l = mp * mean_l + (1.0 - mp) * l
    new_S_l = S_l + (l - mean_l) * (l - new_mean_l)
    new_std_l = jnp.sqrt(new_S_l * inv_it1 + 1e-8)
    new_mean_L = mp * mean_L + (1.0 - mp) * L

    # Whole-tile assembly via sublane-iota select (no concat chain), keeping
    # rows 5..7 (always zero) from the aliased input tile, then ONE full
    # unmasked (8, lanes) store.
    sub_idx = jax.lax.broadcasted_iota(jnp.int32, (_NUM_ROWS, lanes), 0)

    def _place(row, vec, acc):
        return jnp.where(sub_idx == row,
                         jnp.broadcast_to(vec, (_NUM_ROWS, lanes)), acc)

    packed = st
    packed = _place(_ROW_MEAN_L_BIG, new_mean_L, packed)
    packed = _place(_ROW_MEAN_l, new_mean_l, packed)
    packed = _place(_ROW_S_l, new_S_l, packed)
    packed = _place(_ROW_STD_l, new_std_l, packed)
    packed = _place(_ROW_ALPHAS, alphas, packed)

    state_out_ref[...] = packed               # single full-tile store
    iter_out_ref[0] = t


def _padded_lanes(num_losses):
    return max(_LANE, ((num_losses + _LANE - 1) // _LANE) * _LANE)


def init_state(num_losses):
    lanes = _padded_lanes(num_losses)
    packed = jnp.zeros((_NUM_ROWS, lanes), jnp.float32)
    # alphas buffer initialized to ones (mirrors the PyTorch register_buffer).
    packed = packed.at[_ROW_ALPHAS, :num_losses].set(1.0)
    return {
        "current_iter": jnp.full((1,), -1, jnp.int32),
        "packed": packed,
    }


def unpack_state(state, num_losses):
    p = state["packed"]
    return {
        "running_mean_L": p[_ROW_MEAN_L_BIG, :num_losses],
        "running_mean_l": p[_ROW_MEAN_l, :num_losses],
        "running_S_l": p[_ROW_S_l, :num_losses],
        "running_std_l": p[_ROW_STD_l, :num_losses],
        "alphas": p[_ROW_ALPHAS, :num_losses],
    }


@functools.lru_cache(maxsize=None)
def _make_train_step(num_losses, lanes, decay_flag, decay_param):
    """Build (once) the pallas_call + jit-compiled training step."""
    kernel = functools.partial(_cov_weighting_kernel, num_losses,
                               decay_flag, decay_param)
    smem = pl.BlockSpec(memory_space=pltpu.SMEM)
    vmem = pl.BlockSpec(memory_space=pltpu.VMEM)

    call = pl.pallas_call(
        kernel,
        out_shape=(
            jax.ShapeDtypeStruct((_NUM_ROWS, lanes), jnp.float32),  # state
            jax.ShapeDtypeStruct((1,), jnp.int32),                  # iter
            jax.ShapeDtypeStruct((1, 1), jnp.float32),              # loss
        ),
        in_specs=[smem, vmem, vmem],
        out_specs=(vmem, smem, vmem),
        # packed state and iteration counter updated in place.
        input_output_aliases={2: 0, 0: 1},
    )

    @jax.jit
    def step(L_vec, current_iter, packed):
        L_pad = jnp.pad(L_vec, (0, lanes - num_losses)).reshape(1, lanes)
        packed_out, new_iter, loss = call(current_iter, L_pad, packed)
        return loss[0, 0], packed_out, new_iter

    return step


def cov_weighting_forward(unweighted_losses, state, *, train_flag,
                          decay_flag=True, decay_param=0.9):
    """Returns (loss, new_state). Mirrors CoVWeightingLoss.forward."""
    L_vec = jnp.asarray(unweighted_losses, jnp.float32).reshape(-1)
    num_losses = int(L_vec.shape[0])

    if not train_flag:
        # Eval path: plain sum of the losses, buffers untouched.
        return jnp.sum(L_vec), state

    lanes = int(state["packed"].shape[-1])
    step = _make_train_step(num_losses, lanes, bool(decay_flag),
                            float(decay_param))
    loss, packed_out, new_iter = step(L_vec, state["current_iter"],
                                      state["packed"])
    return loss, {"current_iter": new_iter, "packed": packed_out}


# -----------------------------------------------------------------------------
# Pure numpy reference of one training step (mirrors the PyTorch math).
# -----------------------------------------------------------------------------
def _init_ref(n):
    return {
        "current_iter": -1,
        "alphas": np.ones((n,), np.float32),
        "running_mean_L": np.zeros((n,), np.float32),
        "running_mean_l": np.zeros((n,), np.float32),
        "running_S_l": np.zeros((n,), np.float32),
        "running_std_l": np.zeros((n,), np.float32),
    }


def _reference_step(L, ref, decay_flag, decay_param):
    n = L.shape[0]
    t = ref["current_iter"] + 1
    L0 = L.copy() if t == 0 else ref["running_mean_L"]
    l = L / L0
    if t <= 1:
        alphas = np.full((n,), 1.0 / n, np.float32)
    else:
        ls = ref["running_std_l"] / ref["running_mean_l"]
        alphas = (ls / np.sum(ls)).astype(np.float32)
    if t == 0:
        mp = np.float32(0.0)
    elif decay_flag:
        mp = np.float32(decay_param)
    else:
        mp = np.float32(1.0 - 1.0 / (t + 1.0))
    new_mean_l = mp * ref["running_mean_l"] + (1 - mp) * l
    new_S_l = ref["running_S_l"] + (l - ref["running_mean_l"]) * (l - new_mean_l)
    new_std_l = np.sqrt(new_S_l / (t + 1) + 1e-8)
    new_mean_L = mp * ref["running_mean_L"] + (1 - mp) * L
    loss = np.sum(alphas * L)
    new_ref = {
        "current_iter": t,
        "alphas": alphas.astype(np.float32),
        "running_mean_L": new_mean_L.astype(np.float32),
        "running_mean_l": new_mean_l.astype(np.float32),
        "running_S_l": new_S_l.astype(np.float32),
        "running_std_l": new_std_l.astype(np.float32),
    }
    return np.float32(loss), new_ref


if __name__ == "__main__":
    num_losses = 8
    key = jax.random.PRNGKey(0)

    for decay_flag in (True, False):
        decay_param = 0.9
        state = init_state(num_losses)
        ref = _init_ref(num_losses)

        # Four iterations exercise the iter==0, iter==1 and iter>1 branches
        # (and reuse the cached jitted step after the first call).
        for _ in range(4):
            key, sub = jax.random.split(key)
            L_vec = jax.random.uniform(sub, (num_losses,), jnp.float32, 0.1, 2.0)

            loss, state = cov_weighting_forward(
                L_vec, state, train_flag=True,
                decay_flag=decay_flag, decay_param=decay_param)
            loss = jax.block_until_ready(loss)

            ref_loss, ref = _reference_step(np.asarray(L_vec, np.float32), ref,
                                            decay_flag, decay_param)

            np.testing.assert_allclose(np.asarray(loss), ref_loss,
                                       rtol=1e-5, atol=1e-6)
            got = unpack_state(state, num_losses)
            for k in ("alphas", "running_mean_L", "running_mean_l",
                      "running_S_l", "running_std_l"):
                np.testing.assert_allclose(np.asarray(got[k]), ref[k],
                                           rtol=1e-5, atol=1e-6, err_msg=k)
            assert int(state["current_iter"][0]) == ref["current_iter"]

    # Eval-mode path: plain sum of the losses, buffers untouched.
    key, sub = jax.random.split(key)
    L_vec = jax.random.uniform(sub, (num_losses,), jnp.float32, 0.1, 2.0)
    eval_loss, state = cov_weighting_forward(L_vec, state, train_flag=False)
    eval_loss = jax.block_until_ready(eval_loss)
    np.testing.assert_allclose(np.asarray(eval_loss),
                               np.asarray(jnp.sum(L_vec)),
                               rtol=1e-6, atol=1e-6)

    print("KERNEL_OK")
</pallas_src>

<mosaic_0001>
module attributes {stable_mosaic.version = 11 : i64} {
  func.func @_cov_weighting_kernel(%arg0: memref<1xi32, #tpu.memory_space<smem>>, %arg1: memref<1x128xf32, #tpu.memory_space<vmem>>, %arg2: memref<8x128xf32, #tpu.memory_space<vmem>>, %arg3: memref<8x128xf32, #tpu.memory_space<vmem>>, %arg4: memref<1xi32, #tpu.memory_space<smem>>, %arg5: memref<1x1xf32, #tpu.memory_space<vmem>>) attributes {dimension_semantics = [], scalar_prefetch = 0 : i64, scratch_operands = 0 : i64, tpu.core_type = #tpu.core_type<tc>} {
    %c0 = arith.constant 0 : index
    %0 = memref.load %arg0[%c0] : memref<1xi32, #tpu.memory_space<smem>>
    %c1_i32 = arith.constant 1 : i32
    %1 = arith.addi %0, %c1_i32 : i32
    %2 = arith.sitofp %1 : i32 to f32
    %cst = arith.constant 1.000000e+00 : f32
    %3 = arith.addf %2, %cst : f32
    %cst_0 = arith.constant 1.000000e+00 : f32
    %4 = arith.divf %cst_0, %3 : f32
    %c0_1 = arith.constant 0 : index
    %c0_2 = arith.constant 0 : index
    %5 = vector.load %arg2[%c0_1, %c0_2] : memref<8x128xf32, #tpu.memory_space<vmem>>, vector<8x128xf32>
    %c0_3 = arith.constant 0 : index
    %c0_4 = arith.constant 0 : index
    %6 = vector.load %arg1[%c0_3, %c0_4] : memref<1x128xf32, #tpu.memory_space<vmem>>, vector<1x128xf32>
    %7 = vector.extract_strided_slice %5 {offsets = [0, 0], sizes = [1, 128], strides = [1, 1]} : vector<8x128xf32> to vector<1x128xf32>
    %8 = vector.extract_strided_slice %5 {offsets = [1, 0], sizes = [1, 128], strides = [1, 1]} : vector<8x128xf32> to vector<1x128xf32>
    %9 = vector.extract_strided_slice %5 {offsets = [2, 0], sizes = [1, 128], strides = [1, 1]} : vector<8x128xf32> to vector<1x128xf32>
    %10 = vector.extract_strided_slice %5 {offsets = [3, 0], sizes = [1, 128], strides = [1, 1]} : vector<8x128xf32> to vector<1x128xf32>
    %11 = tpu.iota {dimensions = array<i32: 1>} : vector<1x128xi32>
    %c8_i32 = arith.constant 8 : i32
    %12 = vector.broadcast %c8_i32 : i32 to vector<1x128xi32>
    %13 = arith.cmpi slt, %11, %12 : vector<1x128xi32>
    %c0_i32 = arith.constant 0 : i32
    %14 = arith.cmpi eq, %1, %c0_i32 : i32
    %15 = arith.select %14, %6, %7 : vector<1x128xf32>
    %cst_5 = arith.constant 1.000000e+00 : f32
    %16 = vector.broadcast %cst_5 : f32 to vector<1x128xf32>
    %17 = arith.select %13, %15, %16 : vector<1x128xi1>, vector<1x128xf32>
    %18 = tpu.reciprocal %17 : vector<1x128xf32> -> vector<1x128xf32>
    %19 = arith.mulf %6, %18 : vector<1x128xf32>
    %cst_6 = arith.constant 0.000000e+00 : f32
    %20 = vector.broadcast %cst_6 : f32 to vector<1x128xf32>
    %21 = arith.cmpf oeq, %8, %20 : vector<1x128xf32>
    %cst_7 = arith.constant 1.000000e+00 : f32
    %22 = vector.broadcast %cst_7 : f32 to vector<1x128xf32>
    %23 = arith.select %21, %22, %8 : vector<1x128xi1>, vector<1x128xf32>
    %24 = tpu.reciprocal %23 : vector<1x128xf32> -> vector<1x128xf32>
    %25 = arith.mulf %10, %24 : vector<1x128xf32>
    %cst_8 = arith.constant 0.000000e+00 : f32
    %26 = vector.broadcast %cst_8 : f32 to vector<1x128xf32>
    %27 = arith.select %13, %25, %26 : vector<1x128xi1>, vector<1x128xf32>
    %cst_9 = arith.constant dense<0.000000e+00> : vector<1xf32>
    %28 = vector.multi_reduction <add>, %27, %cst_9 [1] : vector<1x128xf32> to vector<1xf32>
    %29 = vector.shape_cast %28 : vector<1xf32> to vector<1x1xf32>
    %30 = arith.mulf %27, %6 : vector<1x128xf32>
    %cst_10 = arith.constant dense<0.000000e+00> : vector<1xf32>
    %31 = vector.multi_reduction <add>, %30, %cst_10 [1] : vector<1x128xf32> to vector<1xf32>
    %32 = vector.shape_cast %31 : vector<1xf32> to vector<1x1xf32>
    %cst_11 = arith.constant dense<0.000000e+00> : vector<1xf32>
    %33 = vector.multi_reduction <add>, %6, %cst_11 [1] : vector<1x128xf32> to vector<1xf32>
    %34 = vector.shape_cast %33 : vector<1xf32> to vector<1x1xf32>
    %cst_12 = arith.constant 0.000000e+00 : f32
    %35 = vector.broadcast %cst_12 : f32 to vector<1x1xf32>
    %36 = arith.cmpf oeq, %29, %35 : vector<1x1xf32>
    %cst_13 = arith.constant 1.000000e+00 : f32
    %37 = vector.broadcast %cst_13 : f32 to vector<1x1xf32>
    %38 = arith.select %36, %37, %29 : vector<1x1xi1>, vector<1x1xf32>
    %39 = tpu.reciprocal %38 : vector<1x1xf32> -> vector<1x1xf32>
    %cst_14 = arith.constant 1.250000e-01 : f32
    %40 = vector.broadcast %cst_14 : f32 to vector<1x1xf32>
    %41 = arith.mulf %34, %40 : vector<1x1xf32>
    %42 = arith.mulf %32, %39 : vector<1x1xf32>
    %c1_i32_15 = arith.constant 1 : i32
    %43 = arith.cmpi sle, %1, %c1_i32_15 : i32
    %44 = arith.select %43, %41, %42 : vector<1x1xf32>
    %c0_16 = arith.constant 0 : index
    %c0_17 = arith.constant 0 : index
    %45 = vector.load %arg5[%c0_16, %c0_17] : memref<1x1xf32, #tpu.memory_space<vmem>>, vector<1x1xf32>
    tpu.vector_store %arg5[%c0_16, %c0_17], %44 {strides = array<i32>} : memref<1x1xf32, #tpu.memory_space<vmem>>, vector<1x1xf32>,
    %46 = vector.broadcast %39 : vector<1x1xf32> to vector<1x128xf32>
    %47 = arith.mulf %27, %46 : vector<1x128xf32>
    %cst_18 = arith.constant 1.250000e-01 : f32
    %cst_19 = arith.constant 0.000000e+00 : f32
    %48 = vector.broadcast %cst_18 : f32 to vector<1x128xf32>
    %49 = vector.broadcast %cst_19 : f32 to vector<1x128xf32>
    %50 = arith.select %13, %48, %49 : vector<1x128xi1>, vector<1x128xf32>
    %c1_i32_20 = arith.constant 1 : i32
    %51 = arith.cmpi sle, %1, %c1_i32_20 : i32
    %52 = arith.select %51, %50, %47 : vector<1x128xf32>
    %c0_i32_21 = arith.constant 0 : i32
    %53 = arith.cmpi eq, %1, %c0_i32_21 : i32
    %cst_22 = arith.constant 0.000000e+00 : f32
    %cst_23 = arith.constant 0.899999976 : f32
    %54 = arith.select %53, %cst_22, %cst_23 : f32
    %55 = vector.broadcast %54 : f32 to vector<1x128xf32>
    %56 = arith.mulf %55, %8 : vector<1x128xf32>
    %cst_24 = arith.constant 1.000000e+00 : f32
    %57 = arith.subf %cst_24, %54 : f32
    %58 = vector.broadcast %57 : f32 to vector<1x128xf32>
    %59 = arith.mulf %58, %19 : vector<1x128xf32>
    %60 = arith.addf %56, %59 : vector<1x128xf32>
    %61 = arith.subf %19, %8 : vector<1x128xf32>
    %62 = arith.subf %19, %60 : vector<1x128xf32>
    %63 = arith.mulf %61, %62 : vector<1x128xf32>
    %64 = arith.addf %9, %63 : vector<1x128xf32>
    %65 = vector.broadcast %4 : f32 to vector<1x128xf32>
    %66 = arith.mulf %64, %65 : vector<1x128xf32>
    %cst_25 = arith.constant 9.99999993E-9 : f32
    %67 = vector.broadcast %cst_25 : f32 to vector<1x128xf32>
    %68 = arith.addf %66, %67 : vector<1x128xf32>
    %69 = math.sqrt %68 : vector<1x128xf32>
    %70 = vector.broadcast %54 : f32 to vector<1x128xf32>
    %71 = arith.mulf %70, %7 : vector<1x128xf32>
    %cst_26 = arith.constant 1.000000e+00 : f32
    %72 = arith.subf %cst_26, %54 : f32
    %73 = vector.broadcast %72 : f32 to vector<1x128xf32>
    %74 = arith.mulf %73, %6 : vector<1x128xf32>
    %75 = arith.addf %71, %74 : vector<1x128xf32>
    %76 = tpu.iota {dimensions = array<i32: 0>} : vector<8x128xi32>
    %c0_i32_27 = arith.constant 0 : i32
    %77 = vector.broadcast %c0_i32_27 : i32 to vector<8x128xi32>
    %78 = arith.cmpi eq, %76, %77 : vector<8x128xi32>
    %79 = vector.shape_cast %75 : vector<1x128xf32> to vector<1x128xf32>
    %80 = vector.broadcast %79 : vector<1x128xf32> to vector<8x128xf32>
    %81 = arith.select %78, %80, %5 : vector<8x128xi1>, vector<8x128xf32>
    %c1_i32_28 = arith.constant 1 : i32
    %82 = vector.broadcast %c1_i32_28 : i32 to vector<8x128xi32>
    %83 = arith.cmpi eq, %76, %82 : vector<8x128xi32>
    %84 = vector.shape_cast %60 : vector<1x128xf32> to vector<1x128xf32>
    %85 = vector.broadcast %84 : vector<1x128xf32> to vector<8x128xf32>
    %86 = arith.select %83, %85, %81 : vector<8x128xi1>, vector<8x128xf32>
    %c2_i32 = arith.constant 2 : i32
    %87 = vector.broadcast %c2_i32 : i32 to vector<8x128xi32>
    %88 = arith.cmpi eq, %76, %87 : vector<8x128xi32>
    %89 = vector.shape_cast %64 : vector<1x128xf32> to vector<1x128xf32>
    %90 = vector.broadcast %89 : vector<1x128xf32> to vector<8x128xf32>
    %91 = arith.select %88, %90, %86 : vector<8x128xi1>, vector<8x128xf32>
    %c3_i32 = arith.constant 3 : i32
    %92 = vector.broadcast %c3_i32 : i32 to vector<8x128xi32>
    %93 = arith.cmpi eq, %76, %92 : vector<8x128xi32>
    %94 = vector.shape_cast %69 : vector<1x128xf32> to vector<1x128xf32>
    %95 = vector.broadcast %94 : vector<1x128xf32> to vector<8x128xf32>
    %96 = arith.select %93, %95, %91 : vector<8x128xi1>, vector<8x128xf32>
    %c4_i32 = arith.constant 4 : i32
    %97 = vector.broadcast %c4_i32 : i32 to vector<8x128xi32>
    %98 = arith.cmpi eq, %76, %97 : vector<8x128xi32>
    %99 = vector.shape_cast %52 : vector<1x128xf32> to vector<1x128xf32>
    %100 = vector.broadcast %99 : vector<1x128xf32> to vector<8x128xf32>
    %101 = arith.select %98, %100, %96 : vector<8x128xi1>, vector<8x128xf32>
    %c0_29 = arith.constant 0 : index
    %c0_30 = arith.constant 0 : index
    %102 = vector.load %arg3[%c0_29, %c0_30] : memref<8x128xf32, #tpu.memory_space<vmem>>, vector<8x128xf32>
    tpu.vector_store %arg3[%c0_29, %c0_30], %101 {strides = array<i32>} : memref<8x128xf32, #tpu.memory_space<vmem>>, vector<8x128xf32>,
    %c0_31 = arith.constant 0 : index
    %103 = memref.load %arg4[%c0_31] : memref<1xi32, #tpu.memory_space<smem>>
    memref.store %1, %arg4[%c0_31] : memref<1xi32, #tpu.memory_space<smem>>
    return
  }
}

</mosaic_0001>

<llo_original>
// kernel: step.1
$region0: #{step.1}
  #allocation0 [shape = 'u32[]', space=smem, size = 0x4, offset = 0x4, fixed_abs, tag = 'smem constant byte address 0x4 - core index']
  #allocation1 [shape = 'u32[144,128]{1,0:T(1,128)}', space=vmem, size = 0x12000, scoped, tag = 'internal scratch']
  #allocation2 [shape = 's32[1]{0:T(128)S(6)}', space=smem, size = 0x200, scoped, tag = 'scoped memory for step.1']
  %s0 = inlined_call_operand.<no memory space> [shape: s32[1], index: 0, kind: input, shape index: {}, may-alias: {0,4}]
  %s1 = inlined_call_operand.vmem [shape: f32[1,128], index: 1, kind: input, shape index: {}]
  %s2 = inlined_call_operand.vmem [shape: f32[8,128], index: 2, kind: input, shape index: {}, may-alias: {2,3}]
  %s3 = inlined_call_operand.vmem [shape: f32[8,128], index: 3, kind: output, shape index: {0}, may-alias: {2,3}]
  %s4 = inlined_call_operand.hbm [shape: s32[1], index: 4, kind: output, shape index: {1}, may-alias: {0,4}]
  %s5 = inlined_call_operand.hbm [shape: f32[1,1], index: 5, kind: output, shape index: {2}]
  %6 = xla_tuple %s3, %s4, %s5
  %s7 = sld [smem:[#allocation0]]
  $region38: #{step.1} parent=0
    _
  %s9 = ssub.s32 1, %s7
  %s10 = scalar_select 0, %s9, %s7
  %11 = sst [smem:[#allocation2]] %s0
  $region1: #{step.1} parent=0
    #allocation3 [shape = 'u8[512]{0}', space=smem, size = 0x200, scoped, tag = 'output window, operand 1, single buffered']
    #allocation4 [shape = 's32[1]{0}', space=sflag, size = 0x4, scoped, tag = 'scoped memory for step.1']
    #allocation5 [shape = 's32[1]{0}', space=sflag, size = 0x4, scoped, tag = 'scoped memory for step.1']
    #allocation6 [shape = 'u8[512]{0}', space=vmem, size = 0x400, scoped, tag = 'output window, operand 2, single buffered']
    %12 = vsyncpa [#allocation5], 0
    %13 = vsyncpa [#allocation4], 0
    // Predicated region
    $region2: #{step.1} parent=1 // pred_check
      _
    $region3: #{step.1} parent=1 // pred_check_branch
      %15 = sbr.rel (0) target = $region5
    $region4: #{step.1} parent=1 // pred_region
      _
    $region5: #{step.1} parent=1 // pred_fallthru
      _
    // Predicated region
    $region6: #{step.1} parent=1 // pred_check
      _
    $region7: #{step.1} parent=1 // pred_check_branch
      %17 = sbr.rel (0) target = $region9
    $region8: #{step.1} parent=1 // pred_region
      _
    $region9: #{step.1} parent=1 // pred_fallthru
      _
    // Predicated region
    $region10: #{step.1} parent=1 // pred_check
      _
    $region11: #{step.1} parent=1 // pred_check_branch
      %19 = sbr.rel (0) target = $region13
    $region12: #{step.1} parent=1 // pred_region
      _
    $region13: #{step.1} parent=1 // pred_fallthru
      _
    %s20 = sld [smem:[#allocation2]]
    %s21 = sadd.s32 %s20, 1
    %s22 = scvt.s32.f32 %s21
    %s23 = sadd.f32 %s22, 1.0
    %v24 = vstv %s23
    %v25 = vrcp.pop %v24
    %s26 = vtos %v25
    %v27 = vld [vmem:[%s2] sm:$0xff]
    %v28 = vld [vmem:[%s1] sm:$0x1]
    %v29 = vlaneseq
    %v30 = vand.u32 %v29, 127
    %vm31 = vcmp.lt.s32.totalorder %v30, 8
    %p32 = scmp.eq.s32.totalorder %s21, 0
    %s33 = scalar_select %p32, 1, 0
    %v34 = vstv %s33
    %vm35 = vcmp.eq.s32.totalorder %v34, 1
    %v36 = vsel %vm35, %v28, %v27
    %v37 = vsel %vm31, %v36, 1.0
    %v38 = vrcp.pop %v37
    %v39 = vmul.f32 %v28, %v38
    %vm40 = vcmp.eq.f32.partialorder %v27, 0.0
    %v41 = vsel %vm40, 1.0, %v27
    %v42 = vrcp.pop %v41
    %v44 = vrot.slane %v42, 6
    %v46 = vmul.f32 %v27, %v44
    %v47 = vsel %vm31, %v46, 0.0
    %vm48 = vcmask 1043459
    %v49 = vsel %vm48, %v47, 0.0
    %50 = vadd.xlane.f32.xlu0 %v49
    %v51 = vpop.xlane.xlu0 %50
    %v53 = vlaneseq
    %v54 = vshrl.u32 %v53, 7
    %v55 = vsub.s32 0, %v54
    %v56 = vrot.slane %v28, %v55
    %v58 = vmul.f32 %v47, %v56
    %v59 = vsel %vm48, %v58, 0.0
    %60 = vadd.xlane.f32.xlu0 %v59
    %v61 = vpop.xlane.xlu0 %60
    %vm62 = vcmask 1040384
    %v63 = vsel %vm62, %v28, 0.0
    %64 = vadd.xlane.f32.xlu0 %v63
    %v65 = vpop.xlane.xlu0 %64
    %vm66 = vcmp.eq.f32.partialorder %v51, 0.0
    %v67 = vsel %vm66, 1.0, %v51
    %v68 = vrcp.pop %v67
    %v69 = vmul.f32 %v65, 0.125
    %v70 = vmul.f32 %v61, %v68
    %p71 = scmp.le.s32.totalorder %s21, 1
    %s72 = scalar_select %p71, 1, 0
    %v73 = vstv %s72
    %vm74 = vcmp.eq.s32.totalorder %v73, 1
    %v76 = vrot.slane %v70, 3
    %v78 = vsel %vm74, %v69, %v76
    %vm79 = vcmask 0
    %80 = vst.msk [vmem:[#allocation6] sm:$0x1] %vm79, %v78
    %v81 = vmul.f32 %v47, %v68
    %v82 = vsel %vm31, 0.125, 0.0
    %v83 = vsel %vm74, %v82, %v81
    %s84 = scalar_select %p32, 0.0, 0.9
    %v85 = vstv %s84
    %v86 = vmul.f32 %v85, %v27
    %s87 = ssub.f32 1.0, %s84
    %v88 = vstv %s87
    %v89 = vmul.f32 %v88, %v39
    %v91 = vlaneseq
    %v92 = vshrl.u32 %v91, 7
    %v93 = vsub.s32 0, %v92
    %v94 = vrot.slane %v89, %v93
    %v96 = vadd.f32 %v86, %v94
    %v99 = vunpack.c.l.s4 1966171168
    %v100 = vunpack.c.0.s8 %v99
    %v101 = vlaneseq
    %v102 = vshrl.u32 %v101, 7
    %v103 = vsub.s32 %v100, %v102
    %v104 = vrot.slane %v27, %v103
    %v105 = vcombine.high %v104, %v104
    %v107 = vunpack.c.l.s4 1966171168
    %v108 = vunpack.c.0.s8 %v107
    %v109 = vlaneseq
    %v110 = vshrl.u32 %v109, 7
    %v111 = vsub.s32 %v108, %v110
    %v112 = vrot.slane %v105, %v111
    %v114 = vsub.f32 %v39, %v112
    %v117 = vunpack.c.l.s4 1966171168
    %v118 = vunpack.c.0.s8 %v117
    %v119 = vlaneseq
    %v120 = vshrl.u32 %v119, 7
    %v121 = vsub.s32 %v118, %v120
    %v122 = vrot.slane %v96, %v121
    %v123 = vcombine.high %v122, %v122
    %v125 = vunpack.c.l.s4 1966171168
    %v126 = vunpack.c.0.s8 %v125
    %v127 = vlaneseq
    %v128 = vshrl.u32 %v127, 7
    %v129 = vsub.s32 %v126, %v128
    %v130 = vrot.slane %v123, %v129
    %v132 = vsub.f32 %v39, %v130
    %v133 = vmul.f32 %v114, %v132
    %v135 = vlaneseq
    %v136 = vshrl.u32 %v135, 7
    %v137 = vsub.s32 0, %v136
    %v138 = vrot.slane %v133, %v137
    %v140 = vadd.f32 %v27, %v138
    %v141 = vstv %s26
    %v142 = vmul.f32 %v140, %v141
    %v143 = vadd.f32 %v142, 1e-08
    %v144 = vrsqrt.pop %v143
    %v145 = vmul.f32 %v143, %v144
    %vm146 = vcmp.eq.f32.partialorder %v143, inf
    %v147 = vsel %vm146, %v143, %v145
    %vm148 = vcmp.eq.f32.partialorder %v143, 0.0
    %v149 = vand.u32 %v143, 2147483648
    %v150 = vsel %vm148, %v149, %v147
    %v151 = vmul.f32 %v88, %v28
    %v152 = vadd.f32 %v86, %v151
    %v153 = vlaneseq
    %v154 = vshrl.u32 %v153, 7
    %vm155 = vcmp.eq.s32.totalorder %v154, 0
    %v156 = vlaneseq
    %v157 = vshrl.u32 %v156, 7
    %v158 = vsub.s32 0, %v157
    %v159 = vrot.slane %v152, %v158
    %v160 = vsel %vm155, %v159, %v27
    %vm161 = vcmp.eq.s32.totalorder %v154, 1
    %v162 = vlaneseq
    %v163 = vshrl.u32 %v162, 7
    %v164 = vsub.s32 1, %v163
    %v165 = vrot.slane %v96, %v164
    %v166 = vsel %vm161, %v165, %v160
    %vm167 = vcmp.eq.s32.totalorder %v154, 2
    %v168 = vlaneseq
    %v169 = vshrl.u32 %v168, 7
    %v170 = vsub.s32 2, %v169
    %v171 = vrot.slane %v140, %v170
    %v172 = vsel %vm167, %v171, %v166
    %vm173 = vcmp.eq.s32.totalorder %v154, 3
    %v174 = vlaneseq
    %v175 = vshrl.u32 %v174, 7
    %v176 = vsub.s32 2, %v175
    %v177 = vrot.slane %v150, %v176
    %v178 = vsel %vm173, %v177, %v172
    %vm179 = vcmp.eq.s32.totalorder %v154, 4
    %v180 = vlaneseq
    %v181 = vshrl.u32 %v180, 7
    %v182 = vsub.s32 3, %v181
    %v183 = vrot.slane %v83, %v182
    %v184 = vsel %vm179, %v183, %v178
    %185 = vst [vmem:[%s3] sm:$0xff] %v184
    %s186 = scalar_lea.smem [#allocation3], 0
    %187 = sst [smem:[%s186]] %s21
    // Predicated region
    $region14: #{step.1} parent=1 // pred_check
      _
    $region15: #{step.1} parent=1 // pred_check_branch
      %189 = sbr.rel (0) target = $region17
    $region16: #{step.1} parent=1 // pred_region
      _
    $region17: #{step.1} parent=1 // pred_fallthru
      _
    // Predicated region
    $region18: #{step.1} parent=1 // pred_check
      _
    $region19: #{step.1} parent=1 // pred_check_branch
      %191 = sbr.rel (0) target = $region21
    $region20: #{step.1} parent=1 // pred_region
      %s193 = ssub.s32 16, 16
      %194 = vsyncadd [#allocation5], %s193
      %197 = dma.smem_to_hbm [#allocation3], 16, %s4, [#allocation5]
    $region21: #{step.1} parent=1 // pred_fallthru
      _
    // Predicated region
    $region22: #{step.1} parent=1 // pred_check
      _
    $region23: #{step.1} parent=1 // pred_check_branch
      %199 = sbr.rel (0) target = $region25
    $region24: #{step.1} parent=1 // pred_region
      %s201 = ssub.s32 16, 16
      %202 = vsyncadd [#allocation4], %s201
      %s204 = sshll.u32 [#allocation6], 4
      %s205 = int_to_ptr.vmem [resolvable:$true] %s204
      %207 = dma.vmem_to_hbm [thread:$0]  %s205, 16, %s5, [#allocation4]
    $region25: #{step.1} parent=1 // pred_fallthru
      _
    // Predicated region
    $region26: #{step.1} parent=1 // pred_check
      _
    $region27: #{step.1} parent=1 // pred_check_branch
      %209 = sbr.rel (0) target = $region29
    $region28: #{step.1} parent=1 // pred_region
      _
    $region29: #{step.1} parent=1 // pred_fallthru
      _
    // Predicated region
    $region30: #{step.1} parent=1 // pred_check
      _
    $region31: #{step.1} parent=1 // pred_check_branch
      %211 = sbr.rel (0) target = $region33
    $region32: #{step.1} parent=1 // pred_region
      %212 = dma.done [#allocation5], 16
    $region33: #{step.1} parent=1 // pred_fallthru
      _
    // Predicated region
    $region34: #{step.1} parent=1 // pred_check
      _
    $region35: #{step.1} parent=1 // pred_check_branch
      %214 = sbr.rel (0) target = $region37
    $region36: #{step.1} parent=1 // pred_region
      %215 = dma.done [#allocation4], 16
    $region37: #{step.1} parent=1 // pred_fallthru
      _
    %216 = sfence
    %217 = vsyncpa [#allocation4], 1
    %218 = vsyncpa [#allocation5], 1

</llo_original>
